<compile_context>
chip_gen: v6e
topology: v6e:2x2x1
jax: 0.10.0
libtpu: 0.0.40
codegen_flags: <defaults>
</compile_context>

<pallas_src>
import math

import jax
import jax.numpy as jnp
from jax.experimental import pallas as pl
from jax.experimental.pallas import tpu as pltpu

_MiB = 1024 * 1024


def _round_up(x, m):
    return (x + m - 1) // m * m


def _physical_vmem_bytes():
    """Best-effort physical VMEM size; conservative fallback fits every gen."""
    try:
        cap = int(getattr(pltpu.get_tpu_info(), "vmem_capacity_bytes", 0))
        if cap > 0:
            return cap
    except Exception:
        pass
    try:
        kind = jax.devices()[0].device_kind.lower()
        if "v7" in kind:
            return 64 * _MiB
        if any(v in kind for v in ("v4", "v5", "v6")):
            return 128 * _MiB
    except Exception:
        pass
    return 64 * _MiB


def _buffer_bytes(tile_n, tile_m, h_pad, out_bytes, resident):
    """Conservative VMEM footprint estimate for one kernel configuration."""
    wbuf = 2 if resident else 3                 # Buffered(3) when streaming
    b = 2 * tile_n * h_pad * 2                  # x blocks (bf16, double-buf)
    b += 2 * tile_n * h_pad * out_bytes         # output blocks
    b += wbuf * h_pad * tile_m * 2              # W1 blocks (bf16)
    b += wbuf * tile_m * h_pad * 2              # W2 blocks (bf16)
    b += 2 * (tile_m + h_pad) * 4               # bias blocks (f32)
    b += 2 * tile_n * tile_m * 4                # fc1 intermediate (f32 + bf16)
    if not resident:
        b += tile_n * h_pad * 4                 # f32 accumulator scratch
    return b


def _erf(x):
    # Abramowitz & Stegun 7.1.26 (max abs err 1.5e-7), built only from
    # abs/div/exp/poly/where so it always lowers on TPU; exp goes to the EUP.
    ax = jnp.abs(x)
    t = 1.0 / (1.0 + 0.3275911 * ax)
    poly = ((((1.061405429 * t - 1.453152027) * t + 1.421413741) * t
             - 0.284496736) * t + 0.254829592) * t
    y = 1.0 - poly * jnp.exp(-ax * ax)
    return jnp.where(x < 0, -y, y)


def _gelu_exact(x):
    # torch.nn.functional.gelu default = exact erf formulation.
    return 0.5 * x * (1.0 + _erf(x * 0.7071067811865476))


def _mlp_kernel_resident(x_ref, w1_ref, b1_ref, w2_ref, b2_ref, o_ref):
    """Weights VMEM-resident (m_tiles == 1): one token tile per grid step."""
    h = jnp.dot(x_ref[...], w1_ref[...], preferred_element_type=jnp.float32)
    h = _gelu_exact(h + b1_ref[...])
    # TODO(synk): Dropout is identity in eval mode; training-mode dropout with
    # pltpu.prng_random_bits is not implemented here.
    out = jnp.dot(h.astype(w2_ref.dtype), w2_ref[...],
                  preferred_element_type=jnp.float32)
    o_ref[...] = (out + b2_ref[...]).astype(o_ref.dtype)


def _mlp_kernel_chunked(x_ref, w1_ref, b1_ref, w2_ref, b2_ref, o_ref, acc_ref):
    """M (mlp_dim) axis streamed in chunks; f32 accumulator across chunks."""
    k = pl.program_id(1)

    @pl.when(k == 0)
    def _():
        acc_ref[...] = jnp.zeros_like(acc_ref)

    h = jnp.dot(x_ref[...], w1_ref[...], preferred_element_type=jnp.float32)
    h = _gelu_exact(h + b1_ref[...])
    acc_ref[...] += jnp.dot(h.astype(w2_ref.dtype), w2_ref[...],
                            preferred_element_type=jnp.float32)

    @pl.when(k == pl.num_programs(1) - 1)
    def _():
        o_ref[...] = (acc_ref[...] + b2_ref[...]).astype(o_ref.dtype)


class FusedMlp:
    """Fused MLP; parameters are padded/cast to bf16 once at construction."""

    def __init__(self, w1, b1, w2, b2):
        H, M = w1.shape
        assert w2.shape == (M, H) and b1.shape == (M,) and b2.shape == (H,)
        self.H, self.M = H, M
        self.h_pad = _round_up(H, 128)

        phys = _physical_vmem_bytes()
        # Gen-aware budget: ~96 MiB on 128-MiB chips, ~48 MiB on v7x (64 MiB),
        # leaving headroom for Mosaic internal scratch.
        self.vmem_budget = max(32 * _MiB, int(0.75 * phys))

        # Prefer full weight residency (single M chunk).
        m_full = _round_up(M, 128)
        nominal_tn = 256
        self.resident = (_buffer_bytes(nominal_tn, m_full, self.h_pad, 4, True)
                         <= self.vmem_budget)
        if self.resident:
            self.tile_m = m_full
        else:
            self.tile_m = 128
            for tm in (2048, 1024, 512, 256, 128):
                if _buffer_bytes(nominal_tn, tm, self.h_pad, 4, False) \
                        <= self.vmem_budget:
                    self.tile_m = tm
                    break
        self.m_pad = _round_up(M, self.tile_m)

        # Pad + cast parameters once (hoisted out of the per-call path).
        self.w1 = self._pad2(w1.astype(jnp.bfloat16), self.h_pad, self.m_pad)
        self.w2 = self._pad2(w2.astype(jnp.bfloat16), self.m_pad, self.h_pad)
        self.b1 = self._pad1(b1.astype(jnp.float32), self.m_pad)
        self.b2 = self._pad1(b2.astype(jnp.float32), self.h_pad)

    @staticmethod
    def _pad2(a, r, c):
        if a.shape != (r, c):
            a = jnp.pad(a, ((0, r - a.shape[0]), (0, c - a.shape[1])))
        return a

    @staticmethod
    def _pad1(a, n):
        if a.shape[0] != n:
            a = jnp.pad(a, (0, n - a.shape[0]))
        return a.reshape(1, n)

    def _pick_tile_n(self, N):
        n_round = _round_up(max(N, 1), 16)   # bf16-native (16, 128) tiling
        for tn in (1024, 768, 512, 384, 256, 128, 64, 32, 16):
            tile_n = min(tn, n_round)
            if _buffer_bytes(tile_n, self.tile_m, self.h_pad, 4,
                             self.resident) <= self.vmem_budget:
                return tile_n
        return min(16, n_round)

    def __call__(self, x):
        B, S, H = x.shape
        assert H == self.H
        N = B * S
        h_pad, tile_m = self.h_pad, self.tile_m

        tile_n = self._pick_tile_n(N)
        n_pad = _round_up(N, tile_n)
        n_tiles = n_pad // tile_n
        m_tiles = self.m_pad // tile_m

        x2 = x.reshape(N, H).astype(jnp.bfloat16)
        if (n_pad, h_pad) != (N, H):       # skip the pad op when aligned
            x2 = jnp.pad(x2, ((0, n_pad - N), (0, h_pad - H)))

        vmem_limit = int(min(
            self.vmem_budget,
            max(32 * _MiB,
                2 * _buffer_bytes(tile_n, tile_m, h_pad, 4, self.resident))))

        if self.resident:
            grid = (n_tiles,)
            in_specs = [
                pl.BlockSpec((tile_n, h_pad), lambda i: (i, 0)),   # x tile
                pl.BlockSpec((h_pad, tile_m), lambda i: (0, 0)),   # W1 (once)
                pl.BlockSpec((1, tile_m), lambda i: (0, 0)),       # b1
                pl.BlockSpec((tile_m, h_pad), lambda i: (0, 0)),   # W2 (once)
                pl.BlockSpec((1, h_pad), lambda i: (0, 0)),        # b2
            ]
            out_specs = pl.BlockSpec((tile_n, h_pad), lambda i: (i, 0))
            scratch_shapes = []
            kernel = _mlp_kernel_resident
            dim_sem = ("parallel",)
        else:
            grid = (n_tiles, m_tiles)
            in_specs = [
                pl.BlockSpec((tile_n, h_pad), lambda i, k: (i, 0)),
                pl.BlockSpec((h_pad, tile_m), lambda i, k: (0, k),
                             pipeline_mode=pl.Buffered(3)),
                pl.BlockSpec((1, tile_m), lambda i, k: (0, k)),
                pl.BlockSpec((tile_m, h_pad), lambda i, k: (k, 0),
                             pipeline_mode=pl.Buffered(3)),
                pl.BlockSpec((1, h_pad), lambda i, k: (0, 0)),
            ]
            out_specs = pl.BlockSpec((tile_n, h_pad), lambda i, k: (i, 0))
            scratch_shapes = [pltpu.VMEM((tile_n, h_pad), jnp.float32)]
            kernel = _mlp_kernel_chunked
            dim_sem = ("parallel", "arbitrary")

        out2 = pl.pallas_call(
            kernel,
            out_shape=jax.ShapeDtypeStruct((n_pad, h_pad), x.dtype),
            grid_spec=pltpu.PrefetchScalarGridSpec(
                num_scalar_prefetch=0,
                grid=grid,
                in_specs=in_specs,
                out_specs=out_specs,
                scratch_shapes=scratch_shapes,
            ),
            compiler_params=pltpu.CompilerParams(
                dimension_semantics=dim_sem,
                vmem_limit_bytes=vmem_limit,
            ),
        )(x2, self.w1, self.b1, self.w2, self.b2)

        return out2[:N, :H].reshape(B, S, H)


def mlp_pallas(x, w1, b1, w2, b2):
    """Convenience one-shot wrapper. x: (B,S,H), w1: (H,M), w2: (M,H)."""
    return FusedMlp(w1, b1, w2, b2)(x)


def xavier_uniform(key, fan_in, fan_out, dtype=jnp.float32):
    limit = math.sqrt(6.0 / (fan_in + fan_out))
    return jax.random.uniform(key, (fan_in, fan_out), dtype,
                              minval=-limit, maxval=limit)


if __name__ == "__main__":
    # Small config consistent with the module: hidden_size=32, mlp_dim=64.
    B, S, H, M = 2, 8, 32, 64
    key = jax.random.PRNGKey(0)
    k_x, k_w1, k_b1, k_w2, k_b2 = jax.random.split(key, 5)

    x = jax.random.normal(k_x, (B, S, H), jnp.float32)
    # Parameters initialized as in Mlp._init_weights (deterministic).
    w1 = xavier_uniform(k_w1, H, M)                       # fc1 weight^T
    b1 = 1e-6 * jax.random.normal(k_b1, (M,), jnp.float32)
    w2 = xavier_uniform(k_w2, M, H)                       # fc2 weight^T
    b2 = 1e-6 * jax.random.normal(k_b2, (H,), jnp.float32)

    mlp = FusedMlp(w1, b1, w2, b2)
    out = mlp(x)
    jax.block_until_ready(out)

    # Reference matching the kernel's bf16-input / f32-accumulate numerics.
    xb = x.reshape(-1, H).astype(jnp.bfloat16).astype(jnp.float32)
    w1b = w1.astype(jnp.bfloat16).astype(jnp.float32)
    w2b = w2.astype(jnp.bfloat16).astype(jnp.float32)
    h_ref = _gelu_exact(xb @ w1b + b1)
    ref_q = (h_ref.astype(jnp.bfloat16).astype(jnp.float32) @ w2b
             + b2).reshape(B, S, H)
    assert jnp.allclose(out, ref_q, atol=1e-2, rtol=1e-2), \
        float(jnp.max(jnp.abs(out - ref_q)))

    # Looser sanity check against the pure-f32 exact-erf module semantics.
    ref = jax.nn.gelu(x @ w1 + b1, approximate=False) @ w2 + b2
    assert jnp.allclose(out, ref, atol=1e-1, rtol=1e-1)

    print("KERNEL_OK")
</pallas_src>

<mosaic_0001>
module attributes {stable_mosaic.version = 11 : i64} {
  func.func @_mlp_kernel_resident(%arg0: i32, %arg1: memref<16x128xbf16, #tpu.memory_space<vmem>>, %arg2: memref<128x128xbf16, #tpu.memory_space<vmem>>, %arg3: memref<1x128xf32, #tpu.memory_space<vmem>>, %arg4: memref<128x128xbf16, #tpu.memory_space<vmem>>, %arg5: memref<1x128xf32, #tpu.memory_space<vmem>>, %arg6: memref<16x128xf32, #tpu.memory_space<vmem>>) attributes {dimension_semantics = [#tpu.dimension_semantics<parallel>], iteration_bounds = array<i64: 1>, scalar_prefetch = 0 : i64, scratch_operands = 0 : i64, tpu.core_type = #tpu.core_type<tc>, window_params = [{transform_indices = @transform_0, window_bounds = array<i64: 16, 128>}, {pipeline_mode = #tpu.pipeline_mode<synchronous>, transform_indices = @transform_1, window_bounds = array<i64: 128, 128>}, {pipeline_mode = #tpu.pipeline_mode<synchronous>, transform_indices = @transform_2, window_bounds = array<i64: 1, 128>}, {pipeline_mode = #tpu.pipeline_mode<synchronous>, transform_indices = @transform_3, window_bounds = array<i64: 128, 128>}, {pipeline_mode = #tpu.pipeline_mode<synchronous>, transform_indices = @transform_4, window_bounds = array<i64: 1, 128>}, {transform_indices = @transform_5, window_bounds = array<i64: 16, 128>}]} {
    %c0 = arith.constant 0 : index
    %c0_0 = arith.constant 0 : index
    %0 = vector.load %arg1[%c0, %c0_0] : memref<16x128xbf16, #tpu.memory_space<vmem>>, vector<16x128xbf16>
    %c0_1 = arith.constant 0 : index
    %c0_2 = arith.constant 0 : index
    %1 = vector.load %arg2[%c0_1, %c0_2] : memref<128x128xbf16, #tpu.memory_space<vmem>>, vector<128x128xbf16>
    %cst = arith.constant dense<0.000000e+00> : vector<16x128xf32>
    %2 = tpu.matmul %0, %1, %cst {dimension_numbers = #tpu.dot_dimension_numbers<[1], [0], [0], [1], [0, 0, 1, 1], [], []>} : vector<16x128xbf16>, vector<128x128xbf16>, vector<16x128xf32> -> vector<16x128xf32>
    %c0_3 = arith.constant 0 : index
    %c0_4 = arith.constant 0 : index
    %3 = vector.load %arg3[%c0_3, %c0_4] : memref<1x128xf32, #tpu.memory_space<vmem>>, vector<1x128xf32>
    %4 = vector.broadcast %3 : vector<1x128xf32> to vector<16x128xf32>
    %5 = arith.addf %2, %4 : vector<16x128xf32>
    %cst_5 = arith.constant 5.000000e-01 : f32
    %6 = vector.broadcast %cst_5 : f32 to vector<16x128xf32>
    %7 = arith.mulf %6, %5 : vector<16x128xf32>
    %cst_6 = arith.constant 0.707106769 : f32
    %8 = vector.broadcast %cst_6 : f32 to vector<16x128xf32>
    %9 = arith.mulf %5, %8 : vector<16x128xf32>
    %10 = math.absf %9 : vector<16x128xf32>
    %cst_7 = arith.constant 0.327591091 : f32
    %11 = vector.broadcast %cst_7 : f32 to vector<16x128xf32>
    %12 = arith.mulf %11, %10 : vector<16x128xf32>
    %cst_8 = arith.constant 1.000000e+00 : f32
    %13 = vector.broadcast %cst_8 : f32 to vector<16x128xf32>
    %14 = arith.addf %13, %12 : vector<16x128xf32>
    %cst_9 = arith.constant 1.000000e+00 : f32
    %15 = vector.broadcast %cst_9 : f32 to vector<16x128xf32>
    %16 = arith.divf %15, %14 : vector<16x128xf32>
    %cst_10 = arith.constant 1.06140542 : f32
    %17 = vector.broadcast %cst_10 : f32 to vector<16x128xf32>
    %18 = arith.mulf %17, %16 : vector<16x128xf32>
    %cst_11 = arith.constant 1.45315206 : f32
    %19 = vector.broadcast %cst_11 : f32 to vector<16x128xf32>
    %20 = arith.subf %18, %19 : vector<16x128xf32>
    %21 = arith.mulf %20, %16 : vector<16x128xf32>
    %cst_12 = arith.constant 1.42141378 : f32
    %22 = vector.broadcast %cst_12 : f32 to vector<16x128xf32>
    %23 = arith.addf %21, %22 : vector<16x128xf32>
    %24 = arith.mulf %23, %16 : vector<16x128xf32>
    %cst_13 = arith.constant 0.284496725 : f32
    %25 = vector.broadcast %cst_13 : f32 to vector<16x128xf32>
    %26 = arith.subf %24, %25 : vector<16x128xf32>
    %27 = arith.mulf %26, %16 : vector<16x128xf32>
    %cst_14 = arith.constant 0.254829586 : f32
    %28 = vector.broadcast %cst_14 : f32 to vector<16x128xf32>
    %29 = arith.addf %27, %28 : vector<16x128xf32>
    %30 = arith.mulf %29, %16 : vector<16x128xf32>
    %cst_15 = arith.constant 0.000000e+00 : f32
    %31 = vector.broadcast %cst_15 : f32 to vector<16x128xf32>
    %32 = arith.subf %31, %10 : vector<16x128xf32>
    %33 = arith.mulf %32, %10 : vector<16x128xf32>
    %34 = math.exp %33 : vector<16x128xf32>
    %35 = arith.mulf %30, %34 : vector<16x128xf32>
    %cst_16 = arith.constant 1.000000e+00 : f32
    %36 = vector.broadcast %cst_16 : f32 to vector<16x128xf32>
    %37 = arith.subf %36, %35 : vector<16x128xf32>
    %cst_17 = arith.constant 0.000000e+00 : f32
    %38 = vector.broadcast %cst_17 : f32 to vector<16x128xf32>
    %39 = arith.cmpf olt, %9, %38 : vector<16x128xf32>
    %cst_18 = arith.constant 0.000000e+00 : f32
    %40 = vector.broadcast %cst_18 : f32 to vector<16x128xf32>
    %41 = arith.subf %40, %37 : vector<16x128xf32>
    %42 = arith.select %39, %41, %37 : vector<16x128xi1>, vector<16x128xf32>
    %cst_19 = arith.constant 1.000000e+00 : f32
    %43 = vector.broadcast %cst_19 : f32 to vector<16x128xf32>
    %44 = arith.addf %43, %42 : vector<16x128xf32>
    %45 = arith.mulf %7, %44 : vector<16x128xf32>
    %46 = arith.truncf %45 : vector<16x128xf32> to vector<16x128xbf16>
    %c0_20 = arith.constant 0 : index
    %c0_21 = arith.constant 0 : index
    %47 = vector.load %arg4[%c0_20, %c0_21] : memref<128x128xbf16, #tpu.memory_space<vmem>>, vector<128x128xbf16>
    %cst_22 = arith.constant dense<0.000000e+00> : vector<16x128xf32>
    %48 = tpu.matmul %46, %47, %cst_22 {dimension_numbers = #tpu.dot_dimension_numbers<[1], [0], [0], [1], [0, 0, 1, 1], [], []>} : vector<16x128xbf16>, vector<128x128xbf16>, vector<16x128xf32> -> vector<16x128xf32>
    %c0_23 = arith.constant 0 : index
    %c0_24 = arith.constant 0 : index
    %49 = vector.load %arg5[%c0_23, %c0_24] : memref<1x128xf32, #tpu.memory_space<vmem>>, vector<1x128xf32>
    %50 = vector.broadcast %49 : vector<1x128xf32> to vector<16x128xf32>
    %51 = arith.addf %48, %50 : vector<16x128xf32>
    %c0_25 = arith.constant 0 : index
    %c0_26 = arith.constant 0 : index
    %52 = vector.load %arg6[%c0_25, %c0_26] : memref<16x128xf32, #tpu.memory_space<vmem>>, vector<16x128xf32>
    tpu.vector_store %arg6[%c0_25, %c0_26], %51 {strides = array<i32>} : memref<16x128xf32, #tpu.memory_space<vmem>>, vector<16x128xf32>,
    return
  }
  func.func @transform_0(%arg0: i32) -> (i32, i32) {
    %c0_i32 = arith.constant 0 : i32
    %c0_i32_0 = arith.constant 0 : i32
    return %arg0, %c0_i32 : i32, i32
  }
  func.func @transform_1(%arg0: i32) -> (i32, i32) {
    %c0_i32 = arith.constant 0 : i32
    %c0_i32_0 = arith.constant 0 : i32
    %c0_i32_1 = arith.constant 0 : i32
    return %c0_i32, %c0_i32_0 : i32, i32
  }
  func.func @transform_2(%arg0: i32) -> (i32, i32) {
    %c0_i32 = arith.constant 0 : i32
    %c0_i32_0 = arith.constant 0 : i32
    %c0_i32_1 = arith.constant 0 : i32
    return %c0_i32, %c0_i32_0 : i32, i32
  }
  func.func @transform_3(%arg0: i32) -> (i32, i32) {
    %c0_i32 = arith.constant 0 : i32
    %c0_i32_0 = arith.constant 0 : i32
    %c0_i32_1 = arith.constant 0 : i32
    return %c0_i32, %c0_i32_0 : i32, i32
  }
  func.func @transform_4(%arg0: i32) -> (i32, i32) {
    %c0_i32 = arith.constant 0 : i32
    %c0_i32_0 = arith.constant 0 : i32
    %c0_i32_1 = arith.constant 0 : i32
    return %c0_i32, %c0_i32_0 : i32, i32
  }
  func.func @transform_5(%arg0: i32) -> (i32, i32) {
    %c0_i32 = arith.constant 0 : i32
    %c0_i32_0 = arith.constant 0 : i32
    return %arg0, %c0_i32 : i32, i32
  }
}

</mosaic_0001>

<llo_original>
// kernel: tpu_custom_call.1
$region0: #{tpu_custom_call.1}
  #allocation0 [shape = 'u32[]', space=smem, size = 0x4, offset = 0x4, fixed_abs, tag = 'smem constant byte address 0x4 - core index']
  #allocation1 [shape = 'u32[144,128]{1,0:T(1,128)}', space=vmem, size = 0x12000, scoped, tag = 'internal scratch']
  %s0 = inlined_call_operand.hbm [shape: bf16[16,128], index: 0, kind: input, shape index: {}]
  %s1 = inlined_call_operand.hbm [shape: bf16[128,128], index: 1, kind: input, shape index: {}]
  %s2 = inlined_call_operand.vmem [shape: f32[1,128], index: 2, kind: input, shape index: {}]
  %s3 = inlined_call_operand.hbm [shape: bf16[128,128], index: 3, kind: input, shape index: {}]
  %s4 = inlined_call_operand.vmem [shape: f32[1,128], index: 4, kind: input, shape index: {}]
  %s5 = inlined_call_operand.hbm [shape: f32[16,128], index: 5, kind: output, shape index: {}]
  %s6 = sld [smem:[#allocation0]]
  $region42: #{tpu_custom_call.1} parent=0
    _
  %s8 = ssub.s32 1, %s6
  %s9 = scalar_select 0, %s8, %s6
  $region1: #{tpu_custom_call.1} parent=0
    #allocation2 [shape = 'u8[4096]{0}', space=vmem, size = 0x1000, scoped, tag = 'input window, operand 0, single buffered']
    #allocation3 [shape = 's32[1]{0}', space=sflag, size = 0x4, scoped, tag = 'scoped memory for tpu_custom_call.1']
    #allocation4 [shape = 's32[1]{0}', space=sflag, size = 0x4, scoped, tag = 'scoped memory for tpu_custom_call.1']
    #allocation5 [shape = 'u8[32768]{0}', space=vmem, size = 0x8000, scoped, tag = 'input window, operand 1, single buffered']
    #allocation6 [shape = 's32[1]{0}', space=sflag, size = 0x4, scoped, tag = 'scoped memory for tpu_custom_call.1']
    #allocation7 [shape = 'u8[32768]{0}', space=vmem, size = 0x8000, scoped, tag = 'input window, operand 3, single buffered']
    #allocation8 [shape = 'u8[8192]{0}', space=vmem, size = 0x2000, scoped, tag = 'output window, operand 0, single buffered']
    %10 = vsyncpa [#allocation3], 0
    %11 = vsyncpa [#allocation6], 0
    %12 = vsyncpa [#allocation4], 0
    // Predicated region
    $region2: #{tpu_custom_call.1} parent=1 // pred_check
      _
    $region3: #{tpu_custom_call.1} parent=1 // pred_check_branch
      %14 = sbr.rel (0) target = $region5
    $region4: #{tpu_custom_call.1} parent=1 // pred_region
      %s16 = ssub.s32 128, 128
      %17 = vsyncadd [#allocation3], %s16
      %s18 = sshll.u32 [#allocation2], 4
      %s19 = int_to_ptr.vmem [resolvable:$true] %s18
      %24 = dma.hbm_to_vmem [thread:$0]  %s0, 128, %s19, [#allocation3], 64, 64, 4
    $region5: #{tpu_custom_call.1} parent=1 // pred_fallthru
      _
    // Predicated region
    $region6: #{tpu_custom_call.1} parent=1 // pred_check
      _
    $region7: #{tpu_custom_call.1} parent=1 // pred_check_branch
      %26 = sbr.rel (0) target = $region9
    $region8: #{tpu_custom_call.1} parent=1 // pred_region
      %s28 = ssub.s32 1024, 1024
      %29 = vsyncadd [#allocation6], %s28
      %s30 = sshll.u32 [#allocation5], 4
      %s31 = int_to_ptr.vmem [resolvable:$true] %s30
      %36 = dma.hbm_to_vmem [thread:$0]  %s1, 1024, %s31, [#allocation6], 64, 64, 4
    $region9: #{tpu_custom_call.1} parent=1 // pred_fallthru
      _
    // Predicated region
    $region10: #{tpu_custom_call.1} parent=1 // pred_check
      _
    $region11: #{tpu_custom_call.1} parent=1 // pred_check_branch
      %38 = sbr.rel (0) target = $region13
    $region12: #{tpu_custom_call.1} parent=1 // pred_region
      _
    $region13: #{tpu_custom_call.1} parent=1 // pred_fallthru
      _
    // Predicated region
    $region14: #{tpu_custom_call.1} parent=1 // pred_check
      _
    $region15: #{tpu_custom_call.1} parent=1 // pred_check_branch
      %40 = sbr.rel (0) target = $region17
    $region16: #{tpu_custom_call.1} parent=1 // pred_region
      %s42 = ssub.s32 1024, 1024
      %43 = vsyncadd [#allocation6], %s42
      %s44 = sshll.u32 [#allocation7], 4
      %s45 = int_to_ptr.vmem [resolvable:$true] %s44
      %50 = dma.hbm_to_vmem [thread:$0]  %s3, 1024, %s45, [#allocation6], 64, 64, 4
    $region17: #{tpu_custom_call.1} parent=1 // pred_fallthru
      _
    // Predicated region
    $region18: #{tpu_custom_call.1} parent=1 // pred_check
      _
    $region19: #{tpu_custom_call.1} parent=1 // pred_check_branch
      %52 = sbr.rel (0) target = $region21
    $region20: #{tpu_custom_call.1} parent=1 // pred_region
      _
    $region21: #{tpu_custom_call.1} parent=1 // pred_fallthru
      _
    // Predicated region
    $region22: #{tpu_custom_call.1} parent=1 // pred_check
      _
    $region23: #{tpu_custom_call.1} parent=1 // pred_check_branch
      %54 = sbr.rel (0) target = $region25
    $region24: #{tpu_custom_call.1} parent=1 // pred_region
      %55 = dma.done [#allocation3], 128
    $region25: #{tpu_custom_call.1} parent=1 // pred_fallthru
      _
    // Predicated region
    $region26: #{tpu_custom_call.1} parent=1 // pred_check
      _
    $region27: #{tpu_custom_call.1} parent=1 // pred_check_branch
      %57 = sbr.rel (0) target = $region29
    $region28: #{tpu_custom_call.1} parent=1 // pred_region
      %58 = dma.done [#allocation6], 1024
    $region29: #{tpu_custom_call.1} parent=1 // pred_fallthru
      _
    // Predicated region
    $region30: #{tpu_custom_call.1} parent=1 // pred_check
      _
    $region31: #{tpu_custom_call.1} parent=1 // pred_check_branch
      %60 = sbr.rel (0) target = $region33
    $region32: #{tpu_custom_call.1} parent=1 // pred_region
      %61 = dma.done [#allocation6], 1024
    $region33: #{tpu_custom_call.1} parent=1 // pred_fallthru
      _
    %v63 = vld [vmem:[#allocation2] sm:$0xf]
    %v64 = vld [vmem:[#allocation2 + $0x4] sm:$0xf]
    %v65 = vld [vmem:[#allocation5] sm:$0xf]
    %v66 = vld [vmem:[#allocation5 + $0x4] sm:$0xf]
    %v67 = vld [vmem:[#allocation5 + $0x8] sm:$0xf]
    %v68 = vld [vmem:[#allocation5 + $0xc] sm:$0xf]
    %v69 = vld [vmem:[#allocation5 + $0x10] sm:$0xf]
    %v70 = vld [vmem:[#allocation5 + $0x14] sm:$0xf]
    %v71 = vld [vmem:[#allocation5 + $0x18] sm:$0xf]
    %v72 = vld [vmem:[#allocation5 + $0x1c] sm:$0xf]
    %v73 = vld [vmem:[#allocation5 + $0x20] sm:$0xf]
    %v74 = vld [vmem:[#allocation5 + $0x24] sm:$0xf]
    %v75 = vld [vmem:[#allocation5 + $0x28] sm:$0xf]
    %v76 = vld [vmem:[#allocation5 + $0x2c] sm:$0xf]
    %v77 = vld [vmem:[#allocation5 + $0x30] sm:$0xf]
    %v78 = vld [vmem:[#allocation5 + $0x34] sm:$0xf]
    %v79 = vld [vmem:[#allocation5 + $0x38] sm:$0xf]
    %v80 = vld [vmem:[#allocation5 + $0x3c] sm:$0xf]
    %v81 = vld [vmem:[%s2] sm:$0x1]
    %v83 = vlaneseq
    %v84 = vshrl.u32 %v83, 7
    %v85 = vsub.s32 0, %v84
    %v86 = vrot.slane %v81, %v85
    %v90 = vunpack.c.l.b16 %v63
    %v91 = vunpack.c.l.b16 %v64
    %v92 = vpack.c.b16 %v91, %v90
    %v110 = vunpack.c.l.b16 %v65
    %v111 = vunpack.c.l.b16 %v66
    %v112 = vunpack.c.l.b16 %v67
    %v113 = vunpack.c.l.b16 %v68
    %v114 = vunpack.c.l.b16 %v69
    %v115 = vunpack.c.l.b16 %v70
    %v116 = vunpack.c.l.b16 %v71
    %v117 = vunpack.c.l.b16 %v72
    %v118 = vunpack.c.l.b16 %v73
    %v119 = vunpack.c.l.b16 %v74
    %v120 = vunpack.c.l.b16 %v75
    %v121 = vunpack.c.l.b16 %v76
    %v122 = vunpack.c.l.b16 %v77
    %v123 = vunpack.c.l.b16 %v78
    %v124 = vunpack.c.l.b16 %v79
    %v125 = vunpack.c.l.b16 %v80
    %v126 = vpack.c.b16 %v111, %v110
    %v127 = vpack.c.b16 %v113, %v112
    %v128 = vpack.c.b16 %v115, %v114
    %v129 = vpack.c.b16 %v117, %v116
    %v130 = vpack.c.b16 %v119, %v118
    %v131 = vpack.c.b16 %v121, %v120
    %v132 = vpack.c.b16 %v123, %v122
    %v133 = vpack.c.b16 %v125, %v124
    %142 = vmatprep.subr.bf16.mxu0 0
    %143 = vmatpush1.bf16.msra.mxu0 %v133
    %144 = vmatprep.subr.bf16.mxu0 0
    %145 = vmatpush1.bf16.msra.mxu0 %v132
    %146 = vmatprep.subr.bf16.mxu0 0
    %147 = vmatpush1.bf16.msra.mxu0 %v131
    %148 = vmatprep.subr.bf16.mxu0 0
    %149 = vmatpush1.bf16.msra.mxu0 %v130
    %150 = vmatprep.subr.bf16.mxu0 0
    %151 = vmatpush1.bf16.msra.mxu0 %v129
    %152 = vmatprep.subr.bf16.mxu0 0
    %153 = vmatpush1.bf16.msra.mxu0 %v128
    %154 = vmatprep.subr.bf16.mxu0 0
    %155 = vmatpush1.bf16.msra.mxu0 %v127
    %156 = vmatprep.subr.bf16.mxu0 0
    %157 = vmatpush1.bf16.msra.mxu0 %v126
    %158 = vmatprep.subr.bf16.mxu0 0
    %159 = vmatpush2.bf16.msra.mxu0 0
    %160 = vmatprep.subr.bf16.mxu0 0
    %161 = vmatpush2.bf16.msra.mxu0 0
    %162 = vmatprep.subr.bf16.mxu0 0
    %163 = vmatpush2.bf16.msra.mxu0 0
    %164 = vmatprep.subr.bf16.mxu0 0
    %165 = vmatpush2.bf16.msra.mxu0 0
    %166 = vmatprep.subr.bf16.mxu0 0
    %167 = vmatpush2.bf16.msra.mxu0 0
    %168 = vmatprep.subr.bf16.mxu0 0
    %169 = vmatpush2.bf16.msra.mxu0 0
    %170 = vmatprep.subr.bf16.mxu0 0
    %171 = vmatpush2.bf16.msra.mxu0 0
    %172 = vmatprep.subr.bf16.mxu0 0
    %173 = vmatpush2.bf16.msra.mxu0 0
    %174 = vmatprep.mubr.bf16.mxu0 0
    %175 = vmatmul.mubr.bf16.gmra.mxu0 %v92
    %v176 = vpop.f32.mrf.mxu0
    %v177 = vadd.f32 %v86, %v176
    %v178 = vpop.f32.mrf.mxu0
    %v179 = vpop.f32.mrf.mxu0
    %v180 = vadd.f32 %v86, %v179
    %v181 = vpop.f32.mrf.mxu0
    %182 = vdwg.mxu0
    %v183 = vmul.f32 %v177, 0.5
    %v184 = vmul.f32 %v180, 0.5
    %v185 = vmul.f32 %v177, 0.70710677
    %v186 = vmul.f32 %v180, 0.70710677
    %v187 = vand.u32 2147483647, %v185
    %v188 = vand.u32 2147483647, %v186
    %v189 = vmul.f32 %v187, 0.3275911
    %v190 = vmul.f32 %v188, 0.3275911
    %v191 = vadd.f32 %v189, 1.0
    %v192 = vadd.f32 %v190, 1.0
    %v193 = vrcp.pop %v191
    %v194 = vmul.f32 1.0, %v193
    %v195 = vrcp.pop %v192
    %v196 = vmul.f32 1.0, %v195
    %v197 = vmul.f32 %v194, 1.0614054
    %v198 = vmul.f32 %v196, 1.0614054
    %v199 = vsub.f32 %v197, 1.4531521
    %v200 = vsub.f32 %v198, 1.4531521
    %v201 = vmul.f32 %v199, %v194
    %v202 = vmul.f32 %v200, %v196
    %v203 = vadd.f32 %v201, 1.4214138
    %v204 = vadd.f32 %v202, 1.4214138
    %v205 = vmul.f32 %v203, %v194
    %v206 = vmul.f32 %v204, %v196
    %v207 = vsub.f32 %v205, 0.28449672
    %v208 = vsub.f32 %v206, 0.28449672
    %v209 = vmul.f32 %v207, %v194
    %v210 = vmul.f32 %v208, %v196
    %v211 = vadd.f32 %v209, 0.2548296
    %v212 = vadd.f32 %v210, 0.2548296
    %v213 = vmul.f32 %v211, %v194
    %v214 = vmul.f32 %v212, %v196
    %v215 = vsub.f32 0.0, %v187
    %v216 = vsub.f32 0.0, %v188
    %v217 = vmul.f32 %v215, %v187
    %v218 = vmul.f32 %v216, %v188
    %v219 = vmul.f32 %v217, 1.442695
    %v220 = vpow.pop %v219
    %v221 = vmul.f32 %v218, 1.442695
    %v222 = vpow.pop %v221
    %v223 = vmul.f32 %v213, %v220
    %v224 = vmul.f32 %v214, %v222
    %v225 = vsub.f32 1.0, %v223
    %v226 = vsub.f32 1.0, %v224
    %vm227 = vcmp.lt.f32.partialorder %v185, 0.0
    %vm228 = vcmp.lt.f32.partialorder %v186, 0.0
    %v229 = vsub.f32 0.0, %v225
    %v230 = vsub.f32 0.0, %v226
    %v231 = vsel %vm227, %v229, %v225
    %v232 = vsel %vm228, %v230, %v226
    %v233 = vadd.f32 %v231, 1.0
    %v234 = vadd.f32 %v232, 1.0
    %v235 = vmul.f32 %v183, %v233
    %v236 = vmul.f32 %v184, %v234
    %v237 = vpack.c.bf16 %v236, %v235
    %v238 = vld [vmem:[#allocation7] sm:$0xf]
    %v239 = vld [vmem:[#allocation7 + $0x4] sm:$0xf]
    %v240 = vld [vmem:[#allocation7 + $0x8] sm:$0xf]
    %v241 = vld [vmem:[#allocation7 + $0xc] sm:$0xf]
    %v242 = vld [vmem:[#allocation7 + $0x10] sm:$0xf]
    %v243 = vld [vmem:[#allocation7 + $0x14] sm:$0xf]
    %v244 = vld [vmem:[#allocation7 + $0x18] sm:$0xf]
    %v245 = vld [vmem:[#allocation7 + $0x1c] sm:$0xf]
    %v246 = vld [vmem:[#allocation7 + $0x20] sm:$0xf]
    %v247 = vld [vmem:[#allocation7 + $0x24] sm:$0xf]
    %v248 = vld [vmem:[#allocation7 + $0x28] sm:$0xf]
    %v249 = vld [vmem:[#allocation7 + $0x2c] sm:$0xf]
    %v250 = vld [vmem:[#allocation7 + $0x30] sm:$0xf]
    %v251 = vld [vmem:[#allocation7 + $0x34] sm:$0xf]
    %v252 = vld [vmem:[#allocation7 + $0x38] sm:$0xf]
    %v253 = vld [vmem:[#allocation7 + $0x3c] sm:$0xf]
    %v254 = vld [vmem:[%s4] sm:$0x1]
    %v256 = vlaneseq
    %v257 = vshrl.u32 %v256, 7
    %v258 = vsub.s32 0, %v257
    %v259 = vrot.slane %v254, %v258
    %v277 = vunpack.c.l.b16 %v238
    %v278 = vunpack.c.l.b16 %v239
    %v279 = vunpack.c.l.b16 %v240
    %v280 = vunpack.c.l.b16 %v241
    %v281 = vunpack.c.l.b16 %v242
    %v282 = vunpack.c.l.b16 %v243
    %v283 = vunpack.c.l.b16 %v244
    %v284 = vunpack.c.l.b16 %v245
    %v285 = vunpack.c.l.b16 %v246
    %v286 = vunpack.c.l.b16 %v247
    %v287 = vunpack.c.l.b16 %v248
    %v288 = vunpack.c.l.b16 %v249
    %v289 = vunpack.c.l.b16 %v250
    %v290 = vunpack.c.l.b16 %v251
    %v291 = vunpack.c.l.b16 %v252
    %v292 = vunpack.c.l.b16 %v253
    %v293 = vpack.c.b16 %v278, %v277
    %v294 = vpack.c.b16 %v280, %v279
    %v295 = vpack.c.b16 %v282, %v281
    %v296 = vpack.c.b16 %v284, %v283
    %v297 = vpack.c.b16 %v286, %v285
    %v298 = vpack.c.b16 %v288, %v287
    %v299 = vpack.c.b16 %v290, %v289
    %v300 = vpack.c.b16 %v292, %v291
    %309 = vmatprep.subr.bf16.mxu0 0
    %310 = vmatpush1.bf16.msra.mxu0 %v300
    %311 = vmatprep.subr.bf16.mxu0 0
    %312 = vmatpush1.bf16.msra.mxu0 %v299
    %313 = vmatprep.subr.bf16.mxu0 0
    %314 = vmatpush1.bf16.msra.mxu0 %v298
    %315 = vmatprep.subr.bf16.mxu0 0
    %316 = vmatpush1.bf16.msra.mxu0 %v297
    %317 = vmatprep.subr.bf16.mxu0 0
    %318 = vmatpush1.bf16.msra.mxu0 %v296
    %319 = vmatprep.subr.bf16.mxu0 0
    %320 = vmatpush1.bf16.msra.mxu0 %v295
    %321 = vmatprep.subr.bf16.mxu0 0
    %322 = vmatpush1.bf16.msra.mxu0 %v294
    %323 = vmatprep.subr.bf16.mxu0 0
    %324 = vmatpush1.bf16.msra.mxu0 %v293
    %325 = vmatprep.subr.bf16.mxu0 0
    %326 = vmatpush2.bf16.msra.mxu0 0
    %327 = vmatprep.subr.bf16.mxu0 0
    %328 = vmatpush2.bf16.msra.mxu0 0
    %329 = vmatprep.subr.bf16.mxu0 0
    %330 = vmatpush2.bf16.msra.mxu0 0
    %331 = vmatprep.subr.bf16.mxu0 0
    %332 = vmatpush2.bf16.msra.mxu0 0
    %333 = vmatprep.subr.bf16.mxu0 0
    %334 = vmatpush2.bf16.msra.mxu0 0
    %335 = vmatprep.subr.bf16.mxu0 0
    %336 = vmatpush2.bf16.msra.mxu0 0
    %337 = vmatprep.subr.bf16.mxu0 0
    %338 = vmatpush2.bf16.msra.mxu0 0
    %339 = vmatprep.subr.bf16.mxu0 0
    %340 = vmatpush2.bf16.msra.mxu0 0
    %341 = vmatprep.mubr.bf16.mxu0 0
    %342 = vmatmul.mubr.bf16.gmra.mxu0 %v237
    %v343 = vpop.f32.mrf.mxu0
    %v344 = vadd.f32 %v259, %v343
    %v345 = vpop.f32.mrf.mxu0
    %v346 = vpop.f32.mrf.mxu0
    %v347 = vadd.f32 %v259, %v346
    %v348 = vpop.f32.mrf.mxu0
    %349 = vdwg.mxu0
    %350 = vst [vmem:[#allocation8] sm:$0xff] %v344
    %351 = vst [vmem:[#allocation8 + $0x8] sm:$0xff] %v347
    // Predicated region
    $region34: #{tpu_custom_call.1} parent=1 // pred_check
      _
    $region35: #{tpu_custom_call.1} parent=1 // pred_check_branch
      %353 = sbr.rel (0) target = $region37
    $region36: #{tpu_custom_call.1} parent=1 // pred_region
      %s355 = ssub.s32 256, 256
      %356 = vsyncadd [#allocation4], %s355
      %s357 = sshll.u32 [#allocation8], 4
      %s358 = int_to_ptr.vmem [resolvable:$true] %s357
      %363 = dma.vmem_to_hbm [thread:$0]  %s358, 256, %s5, [#allocation4], 128, 128, 8
    $region37: #{tpu_custom_call.1} parent=1 // pred_fallthru
      _
    // Predicated region
    $region38: #{tpu_custom_call.1} parent=1 // pred_check
      _
    $region39: #{tpu_custom_call.1} parent=1 // pred_check_branch
      %365 = sbr.rel (0) target = $region41
    $region40: #{tpu_custom_call.1} parent=1 // pred_region
      %366 = dma.done [#allocation4], 256
    $region41: #{tpu_custom_call.1} parent=1 // pred_fallthru
      _
    %367 = vsyncpa [#allocation3], 1
    %368 = vsyncpa [#allocation6], 1
    %369 = vsyncpa [#allocation4], 1

</llo_original>
